<compile_context>
chip_gen: v7x
topology: tpu7x:2x2x1
jax: 0.10.0
libtpu: 0.0.40
codegen_flags: <defaults>
</compile_context>

<pallas_src>
import numpy as np
import jax
import jax.numpy as jnp
from jax.experimental import pallas as pl
from jax.experimental.pallas import tpu as pltpu


# ----------------------------------------------------------------------------- table ---
def make_positional_encoding(max_len: int, d_model: int, dtype=jnp.float32):
    """Deterministic sinusoidal table, identical to the PyTorch __init__."""
    pe = np.zeros((max_len, d_model), dtype=np.float64)
    position = np.arange(0, max_len)[:, np.newaxis]
    div_term = np.exp(np.arange(0, d_model, 2) * (-np.log(10000.0) / d_model))
    pe[:, 0::2] = np.sin(position * div_term)
    pe[:, 1::2] = np.cos(position * div_term)
    return jnp.asarray(pe[:, np.newaxis, :], dtype=dtype)  # (max_len, 1, d_model)


# -------------------------------------------------------------------- sizing / planning ---
_PATH_3D = "3d_sublane_bcast"     # x (S,B,D)  + pe (S,1,D)   : pe broadcast on sublanes
_PATH_2D_BCAST = "2d_lane_bcast"  # x (S,B*D)  + pe (S,D)     : pe replicated in-kernel
_PATH_2D_TILED = "2d_pretiled"    # x (S,B*D)  + pe (S,B*D)   : pe pre-tiled once (cached)


def _vmem_limit_bytes() -> int:
    try:
        cap = pltpu.get_tpu_info().vmem_capacity_bytes
    except Exception:
        cap = 0
    if cap >= 96 * 1024 * 1024:        # v5e / v6e: 128 MiB physical VMEM
        return 64 * 1024 * 1024
    return 32 * 1024 * 1024            # v7x-class (64 MiB VMEM) and conservative fallback


def _block_budget(vmem_limit: int, buffer_slots: int) -> int:
    # ~25% headroom for the small pe side-stream + Mosaic internal scratch.
    return max(512 * 1024, (vmem_limit * 3 // 4) // buffer_slots)


def _sublane_multiple(dtype) -> int:
    # Sub-32-bit dtypes pack along sublanes -> keep tiles a multiple of the packed row group.
    return 8 * max(1, 4 // jnp.dtype(dtype).itemsize)


def _pick_tile(extent: int, row_bytes: int, target_bytes: int, multiple: int) -> int:
    t = max(1, target_bytes // max(row_bytes, 1))
    t = (t // multiple) * multiple
    if t <= 0:
        t = multiple
    return extent if t >= extent else t


def _plan(S: int, B: int, D: int, dtype):
    vmem_limit = _vmem_limit_bytes()
    itemsize = jnp.dtype(dtype).itemsize
    sub = _sublane_multiple(dtype)
    row_bytes = B * D * itemsize
    # Paths A/B stream x + out at depth 3 (pe stream is <= block/B -> inside headroom).
    target_ab = _block_budget(vmem_limit, 6)
    # Path C streams x + pe + out (pe pre-tiled to x's width; x/out depth 3, pe depth 2).
    target_c = _block_budget(vmem_limit, 8)
    fits_ab = sub * row_bytes <= target_ab
    common = dict(vmem_limit=vmem_limit, sub=sub, itemsize=itemsize)
    if D % 128 == 0 and B % 8 == 0 and fits_ab:
        return dict(path=_PATH_3D, target=target_ab, **common)
    if D % 128 == 0 and fits_ab:
        return dict(path=_PATH_2D_BCAST, target=target_ab, **common)
    return dict(path=_PATH_2D_TILED, target=target_c, **common)


def prepare_pe_operand(pe, S: int, B: int, D: int, dtype):
    """One-time (per S/B/dtype) preparation of the pe operand — hoisted off the hot path."""
    path = _plan(S, B, D, dtype)["path"]
    if path == _PATH_3D:
        return pe[:S].astype(dtype)                 # (S, 1, D)
    pe_sd = pe[:S, 0, :].astype(dtype)              # (S, D)
    if path == _PATH_2D_BCAST:
        return pe_sd
    return jnp.tile(pe_sd, (1, B))                  # (S, B*D), computed once & cached


# ------------------------------------------------------------------------------ kernels ---
def _add_kernel(x_ref, pe_ref, o_ref):
    # Identical block shapes, or pe broadcasting along the batch (sublane) axis (3-D path).
    o_ref[...] = (x_ref[...] + pe_ref[...]).astype(o_ref.dtype)


def _make_lane_bcast_kernel(batch: int):
    def kernel(x_ref, pe_ref, o_ref):
        p = pe_ref[...]                                    # (tile_s, D), D % 128 == 0
        if batch > 1:                                      # replicate across batch on lanes
            p = jnp.concatenate([p] * batch, axis=-1)      # aligned concat -> (tile_s, B*D)
        o_ref[...] = (x_ref[...] + p).astype(o_ref.dtype)
    return kernel


# ------------------------------------------------------------------------------ wrapper ---
def _spec(block_shape, index_map, deep: bool):
    if deep:
        return pl.BlockSpec(block_shape, index_map, pipeline_mode=pl.Buffered(3))
    return pl.BlockSpec(block_shape, index_map)


def _compiler_params(grid_rank: int, vmem_limit: int):
    # "parallel": seq/lane tiles are independent.  CORE_PARALLEL is a v7x-only experiment
    # (2 TCs); left off so the same code stays safe on single-TC v5e/v6e.
    return pltpu.CompilerParams(
        dimension_semantics=("parallel",) * grid_rank,
        vmem_limit_bytes=vmem_limit,
    )


def _forward_impl(x, pe_op, plan, deep_pipeline: bool):
    S, B, D = x.shape
    path, target = plan["path"], plan["target"]
    sub, itemsize, vmem_limit = plan["sub"], plan["itemsize"], plan["vmem_limit"]
    # NOTE: input_output_aliases={0: 0} would write in place; left off because the caller
    # (and the reference check below) keeps x live.  Enable when x can be donated.

    if path == _PATH_3D:
        tile_s = _pick_tile(S, B * D * itemsize, target, sub)
        return pl.pallas_call(
            _add_kernel,
            out_shape=jax.ShapeDtypeStruct((S, B, D), x.dtype),
            grid=(pl.cdiv(S, tile_s),),
            in_specs=[
                _spec((tile_s, B, D), lambda i: (i, 0, 0), deep_pipeline),
                pl.BlockSpec((tile_s, 1, D), lambda i: (i, 0, 0)),   # tiny pe side stream
            ],
            out_specs=_spec((tile_s, B, D), lambda i: (i, 0, 0), deep_pipeline),
            compiler_params=_compiler_params(1, vmem_limit),
        )(x, pe_op)

    L = B * D
    x2 = x.reshape(S, L)   # collapses adjacent minor dims; no data movement

    if path == _PATH_2D_BCAST:
        tile_s = _pick_tile(S, L * itemsize, target, sub)
        out2 = pl.pallas_call(
            _make_lane_bcast_kernel(B),
            out_shape=jax.ShapeDtypeStruct((S, L), x.dtype),
            grid=(pl.cdiv(S, tile_s),),
            in_specs=[
                _spec((tile_s, L), lambda i: (i, 0), deep_pipeline),
                pl.BlockSpec((tile_s, D), lambda i: (i, 0)),         # S*D-byte pe stream
            ],
            out_specs=_spec((tile_s, L), lambda i: (i, 0), deep_pipeline),
            compiler_params=_compiler_params(1, vmem_limit),
        )(x2, pe_op)
        return out2.reshape(S, B, D)

    # _PATH_2D_TILED: pe_op has shape (S, L).  If even a minimum-height row-tile exceeds
    # the block budget, split the lane axis too (guards VMEM on huge B*D).
    if sub * L * itemsize <= target:
        tile_s = _pick_tile(S, L * itemsize, target, sub)
        lane_tile = L
        grid = (pl.cdiv(S, tile_s),)
        imap = lambda i: (i, 0)
    else:
        lane_tile = max(128, ((target // (sub * itemsize)) // 128) * 128)
        lane_tile = min(lane_tile, ((L // 128) * 128) or L)
        tile_s = _pick_tile(S, lane_tile * itemsize, target, sub)
        grid = (pl.cdiv(S, tile_s), pl.cdiv(L, lane_tile))
        imap = lambda i, j: (i, j)
    out2 = pl.pallas_call(
        _add_kernel,
        out_shape=jax.ShapeDtypeStruct((S, L), x.dtype),
        grid=grid,
        in_specs=[
            _spec((tile_s, lane_tile), imap, deep_pipeline),
            pl.BlockSpec((tile_s, lane_tile), imap),
        ],
        out_specs=_spec((tile_s, lane_tile), imap, deep_pipeline),
        compiler_params=_compiler_params(len(grid), vmem_limit),
    )(x2, pe_op)
    return out2.reshape(S, B, D)


def positional_encoding_forward(x, pe, pe_op=None):
    """x: (seq_len, batch, d_model); pe: (max_len, 1, d_model).

    pe_op, if given, is the pre-prepared operand from prepare_pe_operand (avoids the
    per-call slice / cast / tile of the positional table).
    """
    S, B, D = x.shape
    plan = _plan(S, B, D, x.dtype)
    if pe_op is None:
        pe_op = prepare_pe_operand(pe, S, B, D, x.dtype)
    try:
        return _forward_impl(x, pe_op, plan, deep_pipeline=True)
    except Exception:
        # Fallback if this JAX build rejects pipeline_mode=pl.Buffered on pallas_call
        # BlockSpecs; unrelated errors re-raise from the fallback path.
        return _forward_impl(x, pe_op, plan, deep_pipeline=False)


class PositionalEncodingPallas:
    """Functional equivalent of the PyTorch PositionalEncoding forward (dropout is stored
    but never applied by the reference forward, so none is applied here)."""

    def __init__(self, max_len, d_model, dropout_rate=0.1, dtype=jnp.float32):
        self.max_len = max_len
        self.d_model = d_model
        self.dropout_rate = dropout_rate            # parity with the torch module; unused
        self.pe = make_positional_encoding(max_len, d_model, dtype)
        self._pe_ops = {}                           # (S, B, dtype) -> prepared operand

    def __call__(self, x):
        S, B, D = x.shape
        key = (S, B, jnp.dtype(x.dtype).name)
        if key not in self._pe_ops:                 # one-time prep per layout (hoisted)
            self._pe_ops[key] = prepare_pe_operand(self.pe, S, B, D, x.dtype)
        return positional_encoding_forward(x, self.pe, pe_op=self._pe_ops[key])


if __name__ == "__main__":
    # Primary check — shapes implied by the module (d_model=32 < 128 -> pre-tiled 2-D path).
    max_len, d_model, seq_len, batch = 16, 32, 8, 2
    key = jax.random.PRNGKey(0)
    x = jax.random.normal(key, (seq_len, batch, d_model), dtype=jnp.float32)
    module = PositionalEncodingPallas(max_len, d_model)
    out = jax.block_until_ready(module(x))
    ref = x + module.pe[:seq_len]
    np.testing.assert_allclose(np.asarray(out), np.asarray(ref), rtol=1e-6, atol=1e-6)

    # Lane-aligned, small batch (d_model % 128 == 0, B < 8) -> collapsed path with
    # in-kernel pe replication (pe HBM stream is S*D instead of S*B*D).
    m2 = PositionalEncodingPallas(32, 128)
    x2 = jax.random.normal(jax.random.PRNGKey(0), (16, 2, 128), dtype=jnp.float32)
    out2 = jax.block_until_ready(m2(x2))
    np.testing.assert_allclose(np.asarray(out2), np.asarray(x2 + m2.pe[:16]),
                               rtol=1e-6, atol=1e-6)

    # Sublane-friendly batch (B % 8 == 0, d_model % 128 == 0) -> 3-D sublane-broadcast path.
    m3 = PositionalEncodingPallas(32, 128)
    x3 = jax.random.normal(jax.random.PRNGKey(0), (16, 8, 128), dtype=jnp.float32)
    out3 = jax.block_until_ready(m3(x3))
    np.testing.assert_allclose(np.asarray(out3), np.asarray(x3 + m3.pe[:16]),
                               rtol=1e-6, atol=1e-6)

    print("KERNEL_OK")
</pallas_src>

<mosaic_0001>
module attributes {stable_mosaic.version = 11 : i64} {
  func.func @_add_kernel(%arg0: i32, %arg1: memref<8x64xf32, #tpu.memory_space<vmem>>, %arg2: memref<8x64xf32, #tpu.memory_space<vmem>>, %arg3: memref<8x64xf32, #tpu.memory_space<vmem>>) attributes {dimension_semantics = [#tpu.dimension_semantics<parallel>], iteration_bounds = array<i64: 1>, scalar_prefetch = 0 : i64, scratch_operands = 0 : i64, tpu.core_type = #tpu.core_type<tc>, window_params = [{transform_indices = @transform_0, window_bounds = array<i64: 8, 64>}, {transform_indices = @transform_1, window_bounds = array<i64: 8, 64>}, {transform_indices = @transform_2, window_bounds = array<i64: 8, 64>}]} {
    %c0 = arith.constant 0 : index
    %c0_0 = arith.constant 0 : index
    %0 = vector.load %arg1[%c0, %c0_0] : memref<8x64xf32, #tpu.memory_space<vmem>>, vector<8x64xf32>
    %c0_1 = arith.constant 0 : index
    %c0_2 = arith.constant 0 : index
    %1 = vector.load %arg2[%c0_1, %c0_2] : memref<8x64xf32, #tpu.memory_space<vmem>>, vector<8x64xf32>
    %2 = arith.addf %0, %1 : vector<8x64xf32>
    %c0_3 = arith.constant 0 : index
    %c0_4 = arith.constant 0 : index
    %3 = vector.load %arg3[%c0_3, %c0_4] : memref<8x64xf32, #tpu.memory_space<vmem>>, vector<8x64xf32>
    tpu.vector_store %arg3[%c0_3, %c0_4], %2 {strides = array<i32>} : memref<8x64xf32, #tpu.memory_space<vmem>>, vector<8x64xf32>,
    return
  }
  func.func @transform_0(%arg0: i32) -> (i32, i32) {
    %c0_i32 = arith.constant 0 : i32
    %c0_i32_0 = arith.constant 0 : i32
    return %arg0, %c0_i32 : i32, i32
  }
  func.func @transform_1(%arg0: i32) -> (i32, i32) {
    %c0_i32 = arith.constant 0 : i32
    %c0_i32_0 = arith.constant 0 : i32
    return %arg0, %c0_i32 : i32, i32
  }
  func.func @transform_2(%arg0: i32) -> (i32, i32) {
    %c0_i32 = arith.constant 0 : i32
    %c0_i32_0 = arith.constant 0 : i32
    return %arg0, %c0_i32 : i32, i32
  }
}

</mosaic_0001>

<llo_original>
// kernel: tpu_custom_call.1
$region0: #{tpu_custom_call.1}
  #allocation0 [shape = 'u32[]', space=smem, size = 0x4, offset = 0x4, fixed_abs, tag = 'smem constant byte address 0x4 - core index']
  #allocation1 [shape = 'u32[144,128]{1,0:T(1,128)}', space=vmem, size = 0x12000, scoped, tag = 'internal scratch']
  %s0 = inlined_call_operand.hbm [shape: f32[8,64], index: 0, kind: input, shape index: {}]
  %s1 = inlined_call_operand.hbm [shape: f32[8,64], index: 1, kind: input, shape index: {}]
  %s2 = inlined_call_operand.hbm [shape: f32[8,64], index: 2, kind: output, shape index: {}]
  %s3 = sld [smem:[#allocation0]]
  $region26: #{tpu_custom_call.1} parent=0
    _
  %s5 = ssub.s32 1, %s3
  %s6 = scalar_select 0, %s5, %s3
  $region1: #{tpu_custom_call.1} parent=0
    #allocation2 [shape = 'u8[4096]{0}', space=vmem, size = 0x1000, scoped, tag = 'input window, operand 0, single buffered']
    #allocation3 [shape = 's32[1]{0}', space=sflag, size = 0x4, scoped, tag = 'scoped memory for tpu_custom_call.1']
    #allocation4 [shape = 's32[1]{0}', space=sflag, size = 0x4, scoped, tag = 'scoped memory for tpu_custom_call.1']
    #allocation5 [shape = 'u8[4096]{0}', space=vmem, size = 0x1000, scoped, tag = 'input window, operand 1, single buffered']
    #allocation6 [shape = 's32[1]{0}', space=sflag, size = 0x4, scoped, tag = 'scoped memory for tpu_custom_call.1']
    #allocation7 [shape = 'u8[4096]{0}', space=vmem, size = 0x1000, scoped, tag = 'output window, operand 0, single buffered']
    %7 = vsyncpa [#allocation3], 0
    %8 = vsyncpa [#allocation6], 0
    %9 = vsyncpa [#allocation4], 0
    // Predicated region
    $region2: #{tpu_custom_call.1} parent=1 // pred_check
      _
    $region3: #{tpu_custom_call.1} parent=1 // pred_check_branch
      %11 = sbr.rel (0) target = $region5
    $region4: #{tpu_custom_call.1} parent=1 // pred_region
      %s13 = ssub.s32 128, 128
      %14 = vsyncadd [#allocation3], %s13
      %s16 = sshll.u32 [#allocation2], 4
      %s17 = int_to_ptr.vmem [resolvable:$true] %s16
      %19 = dma.hbm_to_vmem [thread:$0]  %s0, 128, %s17, [#allocation3]
    $region5: #{tpu_custom_call.1} parent=1 // pred_fallthru
      _
    // Predicated region
    $region6: #{tpu_custom_call.1} parent=1 // pred_check
      _
    $region7: #{tpu_custom_call.1} parent=1 // pred_check_branch
      %21 = sbr.rel (0) target = $region9
    $region8: #{tpu_custom_call.1} parent=1 // pred_region
      %s23 = ssub.s32 128, 128
      %24 = vsyncadd [#allocation6], %s23
      %s26 = sshll.u32 [#allocation5], 4
      %s27 = int_to_ptr.vmem [resolvable:$true] %s26
      %29 = dma.hbm_to_vmem [thread:$0]  %s1, 128, %s27, [#allocation6]
    $region9: #{tpu_custom_call.1} parent=1 // pred_fallthru
      _
    // Predicated region
    $region10: #{tpu_custom_call.1} parent=1 // pred_check
      _
    $region11: #{tpu_custom_call.1} parent=1 // pred_check_branch
      %31 = sbr.rel (0) target = $region13
    $region12: #{tpu_custom_call.1} parent=1 // pred_region
      %32 = dma.done [#allocation3], 128
    $region13: #{tpu_custom_call.1} parent=1 // pred_fallthru
      _
    // Predicated region
    $region14: #{tpu_custom_call.1} parent=1 // pred_check
      _
    $region15: #{tpu_custom_call.1} parent=1 // pred_check_branch
      %34 = sbr.rel (0) target = $region17
    $region16: #{tpu_custom_call.1} parent=1 // pred_region
      %35 = dma.done [#allocation6], 128
    $region17: #{tpu_custom_call.1} parent=1 // pred_fallthru
      _
    %v36 = vld [vmem:[#allocation2] sm:$0xff]
    %v37 = vld [vmem:[#allocation5] sm:$0xff]
    %v38 = vadd.f32 %v36, %v37
    %vm39 = vcmask 523264
    %40 = vst.msk [vmem:[#allocation7] sm:$0xff] %vm39, %v38
    // Predicated region
    $region18: #{tpu_custom_call.1} parent=1 // pred_check
      _
    $region19: #{tpu_custom_call.1} parent=1 // pred_check_branch
      %42 = sbr.rel (0) target = $region21
    $region20: #{tpu_custom_call.1} parent=1 // pred_region
      %s44 = ssub.s32 128, 128
      %45 = vsyncadd [#allocation4], %s44
      %s47 = sshll.u32 [#allocation7], 4
      %s48 = int_to_ptr.vmem [resolvable:$true] %s47
      %50 = dma.vmem_to_hbm [thread:$0]  %s48, 128, %s2, [#allocation4]
    $region21: #{tpu_custom_call.1} parent=1 // pred_fallthru
      _
    // Predicated region
    $region22: #{tpu_custom_call.1} parent=1 // pred_check
      _
    $region23: #{tpu_custom_call.1} parent=1 // pred_check_branch
      %52 = sbr.rel (0) target = $region25
    $region24: #{tpu_custom_call.1} parent=1 // pred_region
      %53 = dma.done [#allocation4], 128
    $region25: #{tpu_custom_call.1} parent=1 // pred_fallthru
      _
    %54 = vsyncpa [#allocation3], 1
    %55 = vsyncpa [#allocation6], 1
    %56 = vsyncpa [#allocation4], 1

</llo_original>
